<compile_context>
chip_gen: v7x
topology: tpu7x:2x2x1
jax: 0.10.0
libtpu: 0.0.40
codegen_flags: <defaults>
</compile_context>

<pallas_src>
import jax
import jax.numpy as jnp
from jax.experimental import pallas as pl
from jax.experimental.pallas import tpu as pltpu


def _bernoulli_head_kernel(x_ref, w_ref, b_ref, out_ref):
    # x_ref:   (TM, num_inputs)            f32
    # w_ref:   (num_outputs, num_inputs)   f32   (PyTorch Linear layout, NOT transposed)
    # b_ref:   (1, num_outputs)            f32
    # out_ref: (TM, 2*num_outputs)         f32   [ logits | probs ]
    x = x_ref[...]
    w = w_ref[...]
    # Contract on the shared feature axis (axis 1 of both) -> MXU handles the
    # "transposed" stationary operand natively; no external transpose needed.
    logits = jax.lax.dot_general(
        x, w,
        dimension_numbers=(((1,), (1,)), ((), ())),
        preferred_element_type=jnp.float32,
    ) + b_ref[...]
    probs = jax.nn.sigmoid(logits)
    # One fused, denser store instead of two narrow masked stores.
    out_ref[...] = jnp.concatenate([logits, probs], axis=-1)


def bernoulli_head(x, weight, bias, *, tm=512):
    """Compute Bernoulli distribution parameters (logits, probs).

    x:      (B, num_inputs)
    weight: (num_outputs, num_inputs)   -- PyTorch Linear layout (not transposed)
    bias:   (num_outputs,)
    Returns (logits, probs), each (B, num_outputs) float32.
    """
    B, num_inputs = x.shape
    num_outputs = weight.shape[0]

    # Batch tile: full batch if small, otherwise a multiple of 8 (sublane rule).
    TM = min(tm, B)
    if TM != B:
        TM = max(8, (TM // 8) * 8)
    grid = (pl.cdiv(B, TM),)

    b2 = bias.reshape(1, num_outputs).astype(jnp.float32)

    fused = pl.pallas_call(
        _bernoulli_head_kernel,
        out_shape=jax.ShapeDtypeStruct((B, 2 * num_outputs), jnp.float32),
        grid=grid,
        in_specs=[
            # x: tiled over batch
            pl.BlockSpec((TM, num_inputs), lambda i: (i, 0)),
            # weight: whole array, VMEM-resident across all grid steps
            pl.BlockSpec((num_outputs, num_inputs), lambda i: (0, 0)),
            # bias: whole array, VMEM-resident across all grid steps
            pl.BlockSpec((1, num_outputs), lambda i: (0, 0)),
        ],
        out_specs=pl.BlockSpec((TM, 2 * num_outputs), lambda i: (i, 0)),
        compiler_params=pltpu.CompilerParams(
            # batch tiles are independent -> let v7x's 2 TCs split them
            dimension_semantics=("parallel",),
        ),
    )(x.astype(jnp.float32), weight.astype(jnp.float32), b2)

    logits = fused[:, :num_outputs]
    probs = fused[:, num_outputs:]
    return logits, probs


def orthogonal_init(key, rows, cols, dtype=jnp.float32):
    """Deterministic orthogonal init matching nn.init.orthogonal_ (gain=1)."""
    n, m = (rows, cols) if rows >= cols else (cols, rows)
    a = jax.random.normal(key, (n, m), dtype=jnp.float32)
    q, r = jnp.linalg.qr(a)
    q = q * jnp.sign(jnp.diag(r))[None, :]
    if rows < cols:
        q = q.T
    return q[:rows, :cols].astype(dtype)


if __name__ == "__main__":
    key = jax.random.PRNGKey(0)
    k_x, k_w = jax.random.split(key)

    batch = 8
    num_inputs = 32
    num_outputs = 16

    x = jax.random.normal(k_x, (batch, num_inputs), dtype=jnp.float32)
    weight = orthogonal_init(k_w, num_outputs, num_inputs)   # nn.init.orthogonal_
    bias = jnp.zeros((num_outputs,), dtype=jnp.float32)      # nn.init.constant_(x, 0)

    logits, probs = bernoulli_head(x, weight, bias)
    jax.block_until_ready((logits, probs))

    # Reference check against plain JAX
    ref_logits = x @ weight.T + bias
    ref_probs = jax.nn.sigmoid(ref_logits)
    assert jnp.allclose(logits, ref_logits, atol=1e-5, rtol=1e-5)
    assert jnp.allclose(probs, ref_probs, atol=1e-5, rtol=1e-5)

    print("KERNEL_OK")
</pallas_src>

<mosaic_0001>
module attributes {stable_mosaic.version = 11 : i64} {
  func.func @_bernoulli_head_kernel(%arg0: i32, %arg1: memref<8x32xf32, #tpu.memory_space<vmem>>, %arg2: memref<16x32xf32, #tpu.memory_space<vmem>>, %arg3: memref<1x16xf32, #tpu.memory_space<vmem>>, %arg4: memref<8x32xf32, #tpu.memory_space<vmem>>) attributes {dimension_semantics = [#tpu.dimension_semantics<parallel>], iteration_bounds = array<i64: 1>, scalar_prefetch = 0 : i64, scratch_operands = 0 : i64, tpu.core_type = #tpu.core_type<tc>, window_params = [{transform_indices = @transform_0, window_bounds = array<i64: 8, 32>}, {pipeline_mode = #tpu.pipeline_mode<synchronous>, transform_indices = @transform_1, window_bounds = array<i64: 16, 32>}, {pipeline_mode = #tpu.pipeline_mode<synchronous>, transform_indices = @transform_2, window_bounds = array<i64: 1, 16>}, {transform_indices = @transform_3, window_bounds = array<i64: 8, 32>}]} {
    %c0 = arith.constant 0 : index
    %c0_0 = arith.constant 0 : index
    %0 = vector.load %arg1[%c0, %c0_0] : memref<8x32xf32, #tpu.memory_space<vmem>>, vector<8x32xf32>
    %c0_1 = arith.constant 0 : index
    %c0_2 = arith.constant 0 : index
    %1 = vector.load %arg2[%c0_1, %c0_2] : memref<16x32xf32, #tpu.memory_space<vmem>>, vector<16x32xf32>
    %cst = arith.constant dense<0.000000e+00> : vector<8x16xf32>
    %2 = tpu.matmul %0, %1, %cst {dimension_numbers = #tpu.dot_dimension_numbers<[1], [1], [0], [0], [0, 0, 1, 0], [], []>} : vector<8x32xf32>, vector<16x32xf32>, vector<8x16xf32> -> vector<8x16xf32>
    %c0_3 = arith.constant 0 : index
    %c0_4 = arith.constant 0 : index
    %3 = vector.load %arg3[%c0_3, %c0_4] : memref<1x16xf32, #tpu.memory_space<vmem>>, vector<1x16xf32>
    %4 = vector.broadcast %3 : vector<1x16xf32> to vector<8x16xf32>
    %5 = arith.addf %2, %4 : vector<8x16xf32>
    %6 = arith.negf %5 : vector<8x16xf32>
    %7 = math.exp %6 : vector<8x16xf32>
    %cst_5 = arith.constant 1.000000e+00 : f32
    %8 = vector.broadcast %cst_5 : f32 to vector<8x16xf32>
    %9 = arith.addf %8, %7 : vector<8x16xf32>
    %10 = arith.divf %8, %9 : vector<8x16xf32>
    %11 = tpu.concatenate %5, %10 in 1 : vector<8x16xf32>, vector<8x16xf32> -> vector<8x32xf32>
    %c0_6 = arith.constant 0 : index
    %c0_7 = arith.constant 0 : index
    %12 = vector.load %arg4[%c0_6, %c0_7] : memref<8x32xf32, #tpu.memory_space<vmem>>, vector<8x32xf32>
    tpu.vector_store %arg4[%c0_6, %c0_7], %11 {strides = array<i32>} : memref<8x32xf32, #tpu.memory_space<vmem>>, vector<8x32xf32>,
    return
  }
  func.func @transform_0(%arg0: i32) -> (i32, i32) {
    %c0_i32 = arith.constant 0 : i32
    %c0_i32_0 = arith.constant 0 : i32
    return %arg0, %c0_i32 : i32, i32
  }
  func.func @transform_1(%arg0: i32) -> (i32, i32) {
    %c0_i32 = arith.constant 0 : i32
    %c0_i32_0 = arith.constant 0 : i32
    %c0_i32_1 = arith.constant 0 : i32
    return %c0_i32, %c0_i32_0 : i32, i32
  }
  func.func @transform_2(%arg0: i32) -> (i32, i32) {
    %c0_i32 = arith.constant 0 : i32
    %c0_i32_0 = arith.constant 0 : i32
    %c0_i32_1 = arith.constant 0 : i32
    return %c0_i32, %c0_i32_0 : i32, i32
  }
  func.func @transform_3(%arg0: i32) -> (i32, i32) {
    %c0_i32 = arith.constant 0 : i32
    %c0_i32_0 = arith.constant 0 : i32
    return %arg0, %c0_i32 : i32, i32
  }
}

</mosaic_0001>

<llo_original>
// kernel: tpu_custom_call.1
$region0: #{tpu_custom_call.1}
  #allocation0 [shape = 'u32[]', space=smem, size = 0x4, offset = 0x4, fixed_abs, tag = 'smem constant byte address 0x4 - core index']
  #allocation1 [shape = 'u32[144,128]{1,0:T(1,128)}', space=vmem, size = 0x12000, scoped, tag = 'internal scratch']
  %s0 = inlined_call_operand.hbm [shape: f32[8,32], index: 0, kind: input, shape index: {}]
  %s1 = inlined_call_operand.hbm [shape: f32[16,32], index: 1, kind: input, shape index: {}]
  %s2 = inlined_call_operand.vmem [shape: f32[1,16], index: 2, kind: input, shape index: {}]
  %s3 = inlined_call_operand.hbm [shape: f32[8,32], index: 3, kind: output, shape index: {}]
  %s4 = sld [smem:[#allocation0]]
  $region30: #{tpu_custom_call.1} parent=0
    _
  %s6 = ssub.s32 1, %s4
  %s7 = scalar_select 0, %s6, %s4
  $region1: #{tpu_custom_call.1} parent=0
    #allocation2 [shape = 'u8[4096]{0}', space=vmem, size = 0x1000, scoped, tag = 'input window, operand 0, single buffered']
    #allocation3 [shape = 's32[1]{0}', space=sflag, size = 0x4, scoped, tag = 'scoped memory for tpu_custom_call.1']
    #allocation4 [shape = 's32[1]{0}', space=sflag, size = 0x4, scoped, tag = 'scoped memory for tpu_custom_call.1']
    #allocation5 [shape = 'u8[8192]{0}', space=vmem, size = 0x2000, scoped, tag = 'input window, operand 1, single buffered']
    #allocation6 [shape = 's32[1]{0}', space=sflag, size = 0x4, scoped, tag = 'scoped memory for tpu_custom_call.1']
    #allocation7 [shape = 'u8[4096]{0}', space=vmem, size = 0x1000, scoped, tag = 'output window, operand 0, single buffered']
    %8 = vsyncpa [#allocation3], 0
    %9 = vsyncpa [#allocation6], 0
    %10 = vsyncpa [#allocation4], 0
    // Predicated region
    $region2: #{tpu_custom_call.1} parent=1 // pred_check
      _
    $region3: #{tpu_custom_call.1} parent=1 // pred_check_branch
      %12 = sbr.rel (0) target = $region5
    $region4: #{tpu_custom_call.1} parent=1 // pred_region
      %s14 = ssub.s32 128, 128
      %15 = vsyncadd [#allocation3], %s14
      %s17 = sshll.u32 [#allocation2], 4
      %s18 = int_to_ptr.vmem [resolvable:$true] %s17
      %20 = dma.hbm_to_vmem [thread:$0]  %s0, 128, %s18, [#allocation3]
    $region5: #{tpu_custom_call.1} parent=1 // pred_fallthru
      _
    // Predicated region
    $region6: #{tpu_custom_call.1} parent=1 // pred_check
      _
    $region7: #{tpu_custom_call.1} parent=1 // pred_check_branch
      %22 = sbr.rel (0) target = $region9
    $region8: #{tpu_custom_call.1} parent=1 // pred_region
      %s24 = ssub.s32 256, 256
      %25 = vsyncadd [#allocation6], %s24
      %s26 = sshll.u32 [#allocation5], 4
      %s27 = int_to_ptr.vmem [resolvable:$true] %s26
      %32 = dma.hbm_to_vmem [thread:$0]  %s1, 256, %s27, [#allocation6], 128, 128, 8
    $region9: #{tpu_custom_call.1} parent=1 // pred_fallthru
      _
    // Predicated region
    $region10: #{tpu_custom_call.1} parent=1 // pred_check
      _
    $region11: #{tpu_custom_call.1} parent=1 // pred_check_branch
      %34 = sbr.rel (0) target = $region13
    $region12: #{tpu_custom_call.1} parent=1 // pred_region
      _
    $region13: #{tpu_custom_call.1} parent=1 // pred_fallthru
      _
    // Predicated region
    $region14: #{tpu_custom_call.1} parent=1 // pred_check
      _
    $region15: #{tpu_custom_call.1} parent=1 // pred_check_branch
      %36 = sbr.rel (0) target = $region17
    $region16: #{tpu_custom_call.1} parent=1 // pred_region
      %37 = dma.done [#allocation3], 128
    $region17: #{tpu_custom_call.1} parent=1 // pred_fallthru
      _
    // Predicated region
    $region18: #{tpu_custom_call.1} parent=1 // pred_check
      _
    $region19: #{tpu_custom_call.1} parent=1 // pred_check_branch
      %39 = sbr.rel (0) target = $region21
    $region20: #{tpu_custom_call.1} parent=1 // pred_region
      %40 = dma.done [#allocation6], 256
    $region21: #{tpu_custom_call.1} parent=1 // pred_fallthru
      _
    %v41 = vld [vmem:[#allocation2] sm:$0xff]
    %v42 = vld [vmem:[#allocation5] sm:$0xff]
    %v43 = vld [vmem:[#allocation5 + $0x8] sm:$0xff]
    %v44 = vld [vmem:[%s2] sm:$0x1]
    %v46 = vlaneseq
    %v47 = vshrl.u32 %v46, 7
    %v48 = vsub.s32 0, %v47
    %v49 = vrot.slane %v44, %v48
    %vm51 = vcmask 261120
    %v53 = vsel %vm51, %v41, 0
    %v56 = vsel %vm51, %v42, 0
    %v59 = vsel %vm51, %v43, 0
    %61 = vmatprep.subr.mxu0 0.0
    %62 = vmatpush1.xpose.msra.mxu0 %v56
    %63 = vmatprep.subr.mxu0 0.0
    %64 = vmatpush1.xpose.msra.mxu0 %v59
    %65 = vmatprep.subr.mxu0 0.0
    %66 = vmatpush1.xpose.msra.mxu0 0.0
    %67 = vmatprep.subr.mxu0 0.0
    %68 = vmatpush1.xpose.msra.mxu0 0.0
    %69 = vmatprep.subr.mxu0 0.0
    %70 = vmatpush1.xpose.msra.mxu0 0.0
    %71 = vmatprep.subr.mxu0 0.0
    %72 = vmatpush1.xpose.msra.mxu0 0.0
    %73 = vmatprep.subr.mxu0 0.0
    %74 = vmatpush1.xpose.msra.mxu0 0.0
    %75 = vmatprep.subr.mxu0 0.0
    %76 = vmatpush1.xpose.msra.mxu0 0.0
    %77 = vmatprep.subr.mxu0 0.0
    %78 = vmatpush1.xpose.msra.mxu0 0.0
    %79 = vmatprep.subr.mxu0 0.0
    %80 = vmatpush1.xpose.msra.mxu0 0.0
    %81 = vmatprep.subr.mxu0 0.0
    %82 = vmatpush1.xpose.msra.mxu0 0.0
    %83 = vmatprep.subr.mxu0 0.0
    %84 = vmatpush1.xpose.msra.mxu0 0.0
    %85 = vmatprep.subr.mxu0 0.0
    %86 = vmatpush1.xpose.msra.mxu0 0.0
    %87 = vmatprep.subr.mxu0 0.0
    %88 = vmatpush1.xpose.msra.mxu0 0.0
    %89 = vmatprep.subr.mxu0 0.0
    %90 = vmatpush1.xpose.msra.mxu0 0.0
    %91 = vmatprep.subr.mxu0 0.0
    %92 = vmatpush1.xpose.msra.mxu0 0.0
    %93 = vmatprep.subr.mxu0 0.0
    %94 = vmatpush1.xpose.msra.mxu0 0.0
    %95 = vmatprep.subr.mxu0 0.0
    %96 = vmatpush1.xpose.msra.mxu0 0.0
    %97 = vmatprep.subr.mxu0 0.0
    %98 = vmatpush1.xpose.msra.mxu0 0.0
    %99 = vmatprep.subr.mxu0 0.0
    %100 = vmatpush1.xpose.msra.mxu0 0.0
    %101 = vmatprep.subr.mxu0 0.0
    %102 = vmatpush1.xpose.msra.mxu0 0.0
    %103 = vmatprep.subr.mxu0 0.0
    %104 = vmatpush1.xpose.msra.mxu0 0.0
    %105 = vmatprep.subr.mxu0 0.0
    %106 = vmatpush1.xpose.msra.mxu0 0.0
    %107 = vmatprep.subr.mxu0 0.0
    %108 = vmatpush1.xpose.msra.mxu0 0.0
    %109 = vmatprep.subr.mxu0 0.0
    %110 = vmatpush1.xpose.msra.mxu0 0.0
    %111 = vmatprep.subr.mxu0 0.0
    %112 = vmatpush1.xpose.msra.mxu0 0.0
    %113 = vmatprep.subr.mxu0 0.0
    %114 = vmatpush1.xpose.msra.mxu0 0.0
    %115 = vmatprep.subr.mxu0 0.0
    %116 = vmatpush1.xpose.msra.mxu0 0.0
    %117 = vmatprep.subr.mxu0 0.0
    %118 = vmatpush1.xpose.msra.mxu0 0.0
    %119 = vmatprep.subr.mxu0 0.0
    %120 = vmatpush1.xpose.msra.mxu0 0.0
    %121 = vmatprep.subr.mxu0 0.0
    %122 = vmatpush1.xpose.msra.mxu0 0.0
    %123 = vmatprep.subr.mxu0 0.0
    %124 = vmatpush1.xpose.msra.mxu0 0.0
    %125 = vmatprep.mubr.f32.mxu0 0.0
    %126 = vmatmul.mubr.f32.gmra.mrb[0].mxu0 %v53
    %v127 = vpop.f32.mrb[0].mxu0
    %v128 = vadd.f32 %v49, %v127
    %v129 = vpop.f32.mrb[0].mxu0
    %130 = vdwg.mxu0
    %v131 = vxor.u32 %v128, 2147483648
    %v132 = vmul.f32 %v131, 1.442695
    %v133 = vpow.pop %v132
    %v134 = vadd.f32 %v133, 1.0
    %v135 = vrcp.pop %v134
    %v136 = vmul.f32 1.0, %v135
    %138 = vrot.lane.b32.xlu0 %v136, 16
    %v139 = vpop.permute.xlu0 %138
    %vm141 = vcmask 130048
    %v142 = vsel %vm141, %v128, %v139
    %143 = vst.msk [vmem:[#allocation7] sm:$0xff] %vm51, %v142
    // Predicated region
    $region22: #{tpu_custom_call.1} parent=1 // pred_check
      _
    $region23: #{tpu_custom_call.1} parent=1 // pred_check_branch
      %145 = sbr.rel (0) target = $region25
    $region24: #{tpu_custom_call.1} parent=1 // pred_region
      %s147 = ssub.s32 128, 128
      %148 = vsyncadd [#allocation4], %s147
      %s150 = sshll.u32 [#allocation7], 4
      %s151 = int_to_ptr.vmem [resolvable:$true] %s150
      %153 = dma.vmem_to_hbm [thread:$0]  %s151, 128, %s3, [#allocation4]
    $region25: #{tpu_custom_call.1} parent=1 // pred_fallthru
      _
    // Predicated region
    $region26: #{tpu_custom_call.1} parent=1 // pred_check
      _
    $region27: #{tpu_custom_call.1} parent=1 // pred_check_branch
      %155 = sbr.rel (0) target = $region29
    $region28: #{tpu_custom_call.1} parent=1 // pred_region
      %156 = dma.done [#allocation4], 128
    $region29: #{tpu_custom_call.1} parent=1 // pred_fallthru
      _
    %157 = vsyncpa [#allocation3], 1
    %158 = vsyncpa [#allocation6], 1
    %159 = vsyncpa [#allocation4], 1

</llo_original>
